<compile_context>
chip_gen: v6e
topology: v6e:2x2x1
jax: 0.10.0
libtpu: 0.0.40
codegen_flags: <defaults>
</compile_context>

<pallas_src>
import functools

import jax
import jax.numpy as jnp
from jax.experimental import pallas as pl
from jax.experimental.pallas import tpu as pltpu


def _round_up(x: int, m: int) -> int:
    return ((x + m - 1) // m) * m


_BIAS_ROWS = 8  # biases pre-replicated to one full sublane group


# ----------------------------------------------------------------------------
# Param init (mimics nn.Linear's U(-1/sqrt(fan_in), 1/sqrt(fan_in))), weights
# stored (in, out) = transposed from PyTorch, biases (1, out).
# ----------------------------------------------------------------------------
def init_params(key, obs_size, act_size, hid_size):
    in_size = obs_size + act_size
    dims = [(in_size, hid_size), (hid_size, hid_size), (hid_size, 1)]
    params = []
    for _head in range(2):
        for (fan_in, fan_out) in dims:
            key, kw, kb = jax.random.split(key, 3)
            bound = 1.0 / jnp.sqrt(jnp.float32(fan_in))
            w = jax.random.uniform(kw, (fan_in, fan_out), jnp.float32, -bound, bound)
            b = jax.random.uniform(kb, (1, fan_out), jnp.float32, -bound, bound)
            params += [w, b]
    return tuple(params)


# ----------------------------------------------------------------------------
# Pack the 12 per-head params into one fused, padded, bf16 VMEM slab + offsets.
# ----------------------------------------------------------------------------
def pack_params(params, obs_size, act_size, hid_size):
    (w1a, b1a, w2a, b2a, w3a, b3a,
     w1b, b1b, w2b, b2b, w3b, b3b) = params

    in_size = obs_size + act_size
    H = hid_size
    H2 = 2 * H
    HPAD = max(128, _round_up(H2, 128))   # lane (output) width, 128-aligned
    K2 = _round_up(H2, 8)                 # trimmed contraction depth of layers 2/3
    IN = _round_up(in_size, 8)            # sublane-aligned layer-1 row block

    # Fused layer 1: input is concat(obs, act); cols [0:H)=q1, [H:2H)=q2.
    W1 = jnp.zeros((IN, HPAD), jnp.float32)
    W1 = W1.at[:in_size, 0:H].set(w1a).at[:in_size, H:H2].set(w1b)
    B1 = jnp.zeros((1, HPAD), jnp.float32).at[:, 0:H].set(b1a).at[:, H:H2].set(b1b)

    # Fused layer 2: block-diagonal heads, only the 2H meaningful rows stored.
    W2 = jnp.zeros((K2, HPAD), jnp.float32)
    W2 = W2.at[0:H, 0:H].set(w2a).at[H:H2, H:H2].set(w2b)
    B2 = jnp.zeros((1, HPAD), jnp.float32).at[:, 0:H].set(b2a).at[:, H:H2].set(b2b)

    # Fused layer 3: col 0 = q1, col 1 = q2; only 2H rows stored.
    W3 = jnp.zeros((K2, HPAD), jnp.float32)
    W3 = W3.at[0:H, 0:1].set(w3a).at[H:H2, 1:2].set(w3b)
    B3 = jnp.zeros((1, HPAD), jnp.float32).at[:, 0:1].set(b3a).at[:, 1:2].set(b3b)

    off_w1 = 0
    off_b1 = off_w1 + IN
    off_w2 = off_b1 + _BIAS_ROWS
    off_b2 = off_w2 + K2
    off_w3 = off_b2 + _BIAS_ROWS
    off_b3 = off_w3 + K2
    total = off_b3 + _BIAS_ROWS           # 184 rows for (24, 8, 32)

    slab = jnp.zeros((total, HPAD), jnp.float32)
    slab = slab.at[off_w1:off_w1 + IN, :].set(W1)
    slab = slab.at[off_b1:off_b1 + _BIAS_ROWS, :].set(jnp.tile(B1, (_BIAS_ROWS, 1)))
    slab = slab.at[off_w2:off_w2 + K2, :].set(W2)
    slab = slab.at[off_b2:off_b2 + _BIAS_ROWS, :].set(jnp.tile(B2, (_BIAS_ROWS, 1)))
    slab = slab.at[off_w3:off_w3 + K2, :].set(W3)
    slab = slab.at[off_b3:off_b3 + _BIAS_ROWS, :].set(jnp.tile(B3, (_BIAS_ROWS, 1)))

    offsets = dict(w1=off_w1, b1=off_b1, w2=off_w2, b2=off_b2, w3=off_w3, b3=off_b3,
                   hpad=HPAD, k2=K2)
    # bf16 operands: single MXU pass per matmul and half the weight-slab DMA.
    return slab.astype(jnp.bfloat16), offsets


# ----------------------------------------------------------------------------
# Kernel: fused twin-Q MLP.  One merged activation input + one bf16 weight
# slab in, one lane-dense (B, 128) f32 output out.
# ----------------------------------------------------------------------------
def _twinq_kernel(x_ref, w_ref, out_ref, *, in_size, k2, batch, off):
    f32 = jnp.float32
    bf16 = jnp.bfloat16

    w1 = w_ref[pl.ds(off["w1"], in_size), :]
    w2 = w_ref[pl.ds(off["w2"], k2), :]
    w3 = w_ref[pl.ds(off["w3"], k2), :]

    # Biases were replicated to 8 sublanes: exact-shape read, no broadcast.
    nb = batch if batch <= _BIAS_ROWS else 1
    b1 = w_ref[pl.ds(off["b1"], nb), :].astype(f32)
    b2 = w_ref[pl.ds(off["b2"], nb), :].astype(f32)
    b3 = w_ref[pl.ds(off["b3"], nb), :].astype(f32)

    # Layer 1: x = concat(obs, act) already merged (and bf16) on the host side.
    h = jnp.dot(x_ref[...], w1, preferred_element_type=f32)
    h = jnp.maximum(h + b1, 0.0)
    # Layer 2: block-diagonal fused heads.  Only the first k2 (=2H) lanes of h
    # are nonzero, matching the row-trimmed W2, so the result is unchanged.
    h = jnp.dot(h[:, :k2].astype(bf16), w2, preferred_element_type=f32)
    h = jnp.maximum(h + b2, 0.0)
    # Layer 3: lane 0 = q1, lane 1 = q2, remaining lanes exactly zero.
    out = jnp.dot(h[:, :k2].astype(bf16), w3, preferred_element_type=f32) + b3
    out_ref[...] = out.astype(out_ref.dtype)


def twin_q_forward(obs, act, slab, offsets):
    """Fused ModelSACTwinQ forward.

    Returns a (B, 2) array: column 0 is q1, column 1 is q2
    (slice [:, :1] / [:, 1:2] to recover the PyTorch tuple).
    """
    B = obs.shape[0]
    in_size = obs.shape[1] + act.shape[1]
    hpad = offsets["hpad"]

    # Single merged bf16 activation input: one DMA, one MXU weight push.
    x = jnp.concatenate([obs, act], axis=1).astype(jnp.bfloat16)

    kernel = functools.partial(_twinq_kernel, in_size=in_size, k2=offsets["k2"],
                               batch=B, off=offsets)
    vmem = pl.BlockSpec(memory_space=pltpu.MemorySpace.VMEM)

    # No grid: at B=8 a batch grid is pure per-step overhead.  For B >= 128,
    # tile obs/act/out by 128 (v5e) / 256 (v6e, v7x) rows, give the slab an
    # index_map returning a constant block (weights stay VMEM-resident), and
    # mark the batch axis "parallel" so v7x's two TensorCores split it.
    out = pl.pallas_call(
        kernel,
        out_shape=jax.ShapeDtypeStruct((B, hpad), jnp.float32),
        in_specs=[vmem, vmem],
        out_specs=vmem,
    )(x, slab)
    return out[:, :2]   # single lane slice; q1 = [:, :1], q2 = [:, 1:2]


# ----------------------------------------------------------------------------
# Pure-JAX f32 reference (unfused) for correctness checking.
# ----------------------------------------------------------------------------
def _reference(obs, act, params):
    x = jnp.concatenate([obs, act], axis=1)

    def mlp(w1, b1, w2, b2, w3, b3):
        h = jnp.maximum(x @ w1 + b1, 0.0)
        h = jnp.maximum(h @ w2 + b2, 0.0)
        return h @ w3 + b3

    return mlp(*params[0:6]), mlp(*params[6:12])


if __name__ == "__main__":
    obs_size, act_size, hid_size = 24, 8, 32
    batch = 8

    key = jax.random.PRNGKey(0)
    k_obs, k_act, k_par = jax.random.split(key, 3)
    obs = jax.random.normal(k_obs, (batch, obs_size), jnp.float32)
    act = jax.random.normal(k_act, (batch, act_size), jnp.float32)
    params = init_params(k_par, obs_size, act_size, hid_size)

    slab, offsets = pack_params(params, obs_size, act_size, hid_size)

    fwd = jax.jit(lambda o, a, s: twin_q_forward(o, a, s, offsets))
    q12 = fwd(obs, act, slab)
    jax.block_until_ready(q12)

    q1, q2 = q12[:, 0:1], q12[:, 1:2]
    r1, r2 = _reference(obs, act, params)
    assert q1.shape == (batch, 1) and q2.shape == (batch, 1)
    # bf16 matmul operands (f32 accumulation) -> looser tolerance than pure f32.
    assert jnp.allclose(q1, r1, atol=1e-1, rtol=5e-2)
    assert jnp.allclose(q2, r2, atol=1e-1, rtol=5e-2)

    print("KERNEL_OK")
</pallas_src>

<mosaic_0001>
module attributes {stable_mosaic.version = 11 : i64} {
  func.func @_twinq_kernel(%arg0: memref<8x32xbf16, #tpu.memory_space<vmem>>, %arg1: memref<184x128xbf16, #tpu.memory_space<vmem>>, %arg2: memref<8x128xf32, #tpu.memory_space<vmem>>) attributes {dimension_semantics = [], scalar_prefetch = 0 : i64, scratch_operands = 0 : i64, tpu.core_type = #tpu.core_type<tc>} {
    %c0 = arith.constant 0 : index
    %c0_0 = arith.constant 0 : index
    %0 = vector.load %arg1[%c0, %c0_0] : memref<184x128xbf16, #tpu.memory_space<vmem>>, vector<32x128xbf16>
    %c40 = arith.constant 40 : index
    %c0_1 = arith.constant 0 : index
    %1 = vector.load %arg1[%c40, %c0_1] : memref<184x128xbf16, #tpu.memory_space<vmem>>, vector<64x128xbf16>
    %c112 = arith.constant 112 : index
    %c0_2 = arith.constant 0 : index
    %2 = vector.load %arg1[%c112, %c0_2] : memref<184x128xbf16, #tpu.memory_space<vmem>>, vector<64x128xbf16>
    %c32 = arith.constant 32 : index
    %c0_3 = arith.constant 0 : index
    %3 = vector.load %arg1[%c32, %c0_3] : memref<184x128xbf16, #tpu.memory_space<vmem>>, vector<8x128xbf16>
    %4 = arith.extf %3 : vector<8x128xbf16> to vector<8x128xf32>
    %c104 = arith.constant 104 : index
    %c0_4 = arith.constant 0 : index
    %5 = vector.load %arg1[%c104, %c0_4] : memref<184x128xbf16, #tpu.memory_space<vmem>>, vector<8x128xbf16>
    %6 = arith.extf %5 : vector<8x128xbf16> to vector<8x128xf32>
    %c176 = arith.constant 176 : index
    %c0_5 = arith.constant 0 : index
    %7 = vector.load %arg1[%c176, %c0_5] : memref<184x128xbf16, #tpu.memory_space<vmem>>, vector<8x128xbf16>
    %8 = arith.extf %7 : vector<8x128xbf16> to vector<8x128xf32>
    %c0_6 = arith.constant 0 : index
    %c0_7 = arith.constant 0 : index
    %9 = vector.load %arg0[%c0_6, %c0_7] : memref<8x32xbf16, #tpu.memory_space<vmem>>, vector<8x32xbf16>
    %cst = arith.constant dense<0.000000e+00> : vector<8x128xf32>
    %10 = tpu.matmul %9, %0, %cst {dimension_numbers = #tpu.dot_dimension_numbers<[1], [0], [0], [1], [0, 0, 1, 1], [], []>} : vector<8x32xbf16>, vector<32x128xbf16>, vector<8x128xf32> -> vector<8x128xf32>
    %11 = arith.addf %10, %4 : vector<8x128xf32>
    %cst_8 = arith.constant 0.000000e+00 : f32
    %12 = vector.broadcast %cst_8 : f32 to vector<8x128xf32>
    %13 = arith.maximumf %11, %12 : vector<8x128xf32>
    %14 = vector.extract_strided_slice %13 {offsets = [0, 0], sizes = [8, 64], strides = [1, 1]} : vector<8x128xf32> to vector<8x64xf32>
    %15 = arith.truncf %14 : vector<8x64xf32> to vector<8x64xbf16>
    %cst_9 = arith.constant dense<0.000000e+00> : vector<8x128xf32>
    %16 = tpu.matmul %15, %1, %cst_9 {dimension_numbers = #tpu.dot_dimension_numbers<[1], [0], [0], [1], [0, 0, 1, 1], [], []>} : vector<8x64xbf16>, vector<64x128xbf16>, vector<8x128xf32> -> vector<8x128xf32>
    %17 = arith.addf %16, %6 : vector<8x128xf32>
    %cst_10 = arith.constant 0.000000e+00 : f32
    %18 = vector.broadcast %cst_10 : f32 to vector<8x128xf32>
    %19 = arith.maximumf %17, %18 : vector<8x128xf32>
    %20 = vector.extract_strided_slice %19 {offsets = [0, 0], sizes = [8, 64], strides = [1, 1]} : vector<8x128xf32> to vector<8x64xf32>
    %21 = arith.truncf %20 : vector<8x64xf32> to vector<8x64xbf16>
    %cst_11 = arith.constant dense<0.000000e+00> : vector<8x128xf32>
    %22 = tpu.matmul %21, %2, %cst_11 {dimension_numbers = #tpu.dot_dimension_numbers<[1], [0], [0], [1], [0, 0, 1, 1], [], []>} : vector<8x64xbf16>, vector<64x128xbf16>, vector<8x128xf32> -> vector<8x128xf32>
    %23 = arith.addf %22, %8 : vector<8x128xf32>
    %c0_12 = arith.constant 0 : index
    %c0_13 = arith.constant 0 : index
    %24 = vector.load %arg2[%c0_12, %c0_13] : memref<8x128xf32, #tpu.memory_space<vmem>>, vector<8x128xf32>
    tpu.vector_store %arg2[%c0_12, %c0_13], %23 {strides = array<i32>} : memref<8x128xf32, #tpu.memory_space<vmem>>, vector<8x128xf32>,
    return
  }
}

</mosaic_0001>

<llo_original>
// kernel: _lambda_.1
$region0: #{_lambda_.1}
  #allocation0 [shape = 'u32[]', space=smem, size = 0x4, offset = 0x4, fixed_abs, tag = 'smem constant byte address 0x4 - core index']
  #allocation1 [shape = 'u32[144,128]{1,0:T(1,128)}', space=vmem, size = 0x12000, scoped, tag = 'internal scratch']
  %s0 = inlined_call_operand.vmem [shape: bf16[8,32], index: 0, kind: input, shape index: {}]
  %s1 = inlined_call_operand.hbm [shape: bf16[184,128], index: 1, kind: input, shape index: {}]
  %s2 = inlined_call_operand.vmem [shape: f32[8,128], index: 2, kind: output, shape index: {}]
  %s3 = sld [smem:[#allocation0]]
  $region22: #{_lambda_.1} parent=0
    _
  %s5 = ssub.s32 1, %s3
  %s6 = scalar_select 0, %s5, %s3
  $region1: #{_lambda_.1} parent=0
    #allocation2 [shape = 'u8[47104]{0}', space=vmem, size = 0xb800, scoped, tag = 'input window, operand 1, single buffered']
    #allocation3 [shape = 's32[1]{0}', space=sflag, size = 0x4, scoped, tag = 'scoped memory for _lambda_.1']
    %7 = vsyncpa [#allocation3], 0
    // Predicated region
    $region2: #{_lambda_.1} parent=1 // pred_check
      _
    $region3: #{_lambda_.1} parent=1 // pred_check_branch
      %9 = sbr.rel (0) target = $region5
    $region4: #{_lambda_.1} parent=1 // pred_region
      _
    $region5: #{_lambda_.1} parent=1 // pred_fallthru
      _
    // Predicated region
    $region6: #{_lambda_.1} parent=1 // pred_check
      _
    $region7: #{_lambda_.1} parent=1 // pred_check_branch
      %11 = sbr.rel (0) target = $region9
    $region8: #{_lambda_.1} parent=1 // pred_region
      %s13 = ssub.s32 1472, 1472
      %14 = vsyncadd [#allocation3], %s13
      %s15 = sshll.u32 [#allocation2], 4
      %s16 = int_to_ptr.vmem [resolvable:$true] %s15
      %21 = dma.hbm_to_vmem [thread:$0]  %s1, 1472, %s16, [#allocation3], 64, 64, 4
    $region9: #{_lambda_.1} parent=1 // pred_fallthru
      _
    // Predicated region
    $region10: #{_lambda_.1} parent=1 // pred_check
      _
    $region11: #{_lambda_.1} parent=1 // pred_check_branch
      %23 = sbr.rel (0) target = $region13
    $region12: #{_lambda_.1} parent=1 // pred_region
      %24 = dma.done [#allocation3], 1472
    $region13: #{_lambda_.1} parent=1 // pred_fallthru
      _
    %v26 = vld [vmem:[#allocation2] sm:$0xf]
    %v27 = vld [vmem:[#allocation2 + $0x4] sm:$0xf]
    %v28 = vld [vmem:[#allocation2 + $0x8] sm:$0xf]
    %v29 = vld [vmem:[#allocation2 + $0xc] sm:$0xf]
    %v30 = vld [vmem:[#allocation2 + $0x14] sm:$0xf]
    %v31 = vld [vmem:[#allocation2 + $0x18] sm:$0xf]
    %v32 = vld [vmem:[#allocation2 + $0x1c] sm:$0xf]
    %v33 = vld [vmem:[#allocation2 + $0x20] sm:$0xf]
    %v34 = vld [vmem:[#allocation2 + $0x24] sm:$0xf]
    %v35 = vld [vmem:[#allocation2 + $0x28] sm:$0xf]
    %v36 = vld [vmem:[#allocation2 + $0x2c] sm:$0xf]
    %v37 = vld [vmem:[#allocation2 + $0x30] sm:$0xf]
    %v38 = vld [vmem:[#allocation2 + $0x38] sm:$0xf]
    %v39 = vld [vmem:[#allocation2 + $0x3c] sm:$0xf]
    %v40 = vld [vmem:[#allocation2 + $0x40] sm:$0xf]
    %v41 = vld [vmem:[#allocation2 + $0x44] sm:$0xf]
    %v42 = vld [vmem:[#allocation2 + $0x48] sm:$0xf]
    %v43 = vld [vmem:[#allocation2 + $0x4c] sm:$0xf]
    %v44 = vld [vmem:[#allocation2 + $0x50] sm:$0xf]
    %v45 = vld [vmem:[#allocation2 + $0x54] sm:$0xf]
    %v46 = vld [vmem:[#allocation2 + $0x10] sm:$0xf]
    %v47 = vunpack.c.l.bf16 %v46
    %v48 = vld [vmem:[#allocation2 + $0x34] sm:$0xf]
    %v49 = vunpack.c.l.bf16 %v48
    %v50 = vld [vmem:[#allocation2 + $0x58] sm:$0xf]
    %v51 = vunpack.c.l.bf16 %v50
    %v52 = vld [vmem:[%s0] sm:$0xf]
    %v57 = vunpack.c.l.b16 %v26
    %v58 = vunpack.c.l.b16 %v27
    %v59 = vunpack.c.l.b16 %v28
    %v60 = vunpack.c.l.b16 %v29
    %v61 = vpack.c.b16 %v58, %v57
    %v62 = vpack.c.b16 %v60, %v59
    %vm65 = vcmask 261120
    %v67 = vsel %vm65, %v52, 0
    %69 = vmatprep.subr.bf16.mxu0 0
    %70 = vmatpush1.bf16.msra.mxu0 0
    %71 = vmatprep.subr.bf16.mxu0 0
    %72 = vmatpush1.bf16.msra.mxu0 0
    %73 = vmatprep.subr.bf16.mxu0 0
    %74 = vmatpush1.bf16.msra.mxu0 0
    %75 = vmatprep.subr.bf16.mxu0 0
    %76 = vmatpush1.bf16.msra.mxu0 0
    %77 = vmatprep.subr.bf16.mxu0 0
    %78 = vmatpush1.bf16.msra.mxu0 0
    %79 = vmatprep.subr.bf16.mxu0 0
    %80 = vmatpush1.bf16.msra.mxu0 0
    %81 = vmatprep.subr.bf16.mxu0 0
    %82 = vmatpush1.bf16.msra.mxu0 %v62
    %83 = vmatprep.subr.bf16.mxu0 0
    %84 = vmatpush1.bf16.msra.mxu0 %v61
    %85 = vmatprep.subr.bf16.mxu0 0
    %86 = vmatpush2.bf16.msra.mxu0 0
    %87 = vmatprep.subr.bf16.mxu0 0
    %88 = vmatpush2.bf16.msra.mxu0 0
    %89 = vmatprep.subr.bf16.mxu0 0
    %90 = vmatpush2.bf16.msra.mxu0 0
    %91 = vmatprep.subr.bf16.mxu0 0
    %92 = vmatpush2.bf16.msra.mxu0 0
    %93 = vmatprep.subr.bf16.mxu0 0
    %94 = vmatpush2.bf16.msra.mxu0 0
    %95 = vmatprep.subr.bf16.mxu0 0
    %96 = vmatpush2.bf16.msra.mxu0 0
    %97 = vmatprep.subr.bf16.mxu0 0
    %98 = vmatpush2.bf16.msra.mxu0 0
    %99 = vmatprep.subr.bf16.mxu0 0
    %100 = vmatpush2.bf16.msra.mxu0 0
    %101 = vmatprep.mubr.bf16.mxu0 0
    %102 = vmatmul.mubr.bf16.gmra.mxu0 %v67
    %v103 = vpop.f32.mrf.mxu0
    %v104 = vadd.f32 %v47, %v103
    %v105 = vpop.f32.mrf.mxu0
    %v106 = vpop.f32.mrf.mxu0
    %v107 = vpop.f32.mrf.mxu0
    %108 = vdwg.mxu0
    %v109 = vmax.f32 %v104, 0.0
    %v110 = vpack.c.bf16 %v109, %v109
    %v119 = vunpack.c.l.b16 %v30
    %v120 = vunpack.c.l.b16 %v31
    %v121 = vunpack.c.l.b16 %v32
    %v122 = vunpack.c.l.b16 %v33
    %v123 = vunpack.c.l.b16 %v34
    %v124 = vunpack.c.l.b16 %v35
    %v125 = vunpack.c.l.b16 %v36
    %v126 = vunpack.c.l.b16 %v37
    %v127 = vpack.c.b16 %v120, %v119
    %v128 = vpack.c.b16 %v122, %v121
    %v129 = vpack.c.b16 %v124, %v123
    %v130 = vpack.c.b16 %v126, %v125
    %vm135 = vcmask 523264
    %v137 = vsel %vm135, %v110, 0
    %139 = vmatprep.subr.bf16.mxu0 0
    %140 = vmatpush1.bf16.msra.mxu0 0
    %141 = vmatprep.subr.bf16.mxu0 0
    %142 = vmatpush1.bf16.msra.mxu0 0
    %143 = vmatprep.subr.bf16.mxu0 0
    %144 = vmatpush1.bf16.msra.mxu0 0
    %145 = vmatprep.subr.bf16.mxu0 0
    %146 = vmatpush1.bf16.msra.mxu0 0
    %147 = vmatprep.subr.bf16.mxu0 0
    %148 = vmatpush1.bf16.msra.mxu0 %v130
    %149 = vmatprep.subr.bf16.mxu0 0
    %150 = vmatpush1.bf16.msra.mxu0 %v129
    %151 = vmatprep.subr.bf16.mxu0 0
    %152 = vmatpush1.bf16.msra.mxu0 %v128
    %153 = vmatprep.subr.bf16.mxu0 0
    %154 = vmatpush1.bf16.msra.mxu0 %v127
    %155 = vmatprep.subr.bf16.mxu0 0
    %156 = vmatpush2.bf16.msra.mxu0 0
    %157 = vmatprep.subr.bf16.mxu0 0
    %158 = vmatpush2.bf16.msra.mxu0 0
    %159 = vmatprep.subr.bf16.mxu0 0
    %160 = vmatpush2.bf16.msra.mxu0 0
    %161 = vmatprep.subr.bf16.mxu0 0
    %162 = vmatpush2.bf16.msra.mxu0 0
    %163 = vmatprep.subr.bf16.mxu0 0
    %164 = vmatpush2.bf16.msra.mxu0 0
    %165 = vmatprep.subr.bf16.mxu0 0
    %166 = vmatpush2.bf16.msra.mxu0 0
    %167 = vmatprep.subr.bf16.mxu0 0
    %168 = vmatpush2.bf16.msra.mxu0 0
    %169 = vmatprep.subr.bf16.mxu0 0
    %170 = vmatpush2.bf16.msra.mxu0 0
    %171 = vmatprep.mubr.bf16.mxu0 0
    %172 = vmatmul.mubr.bf16.gmra.mxu0 %v137
    %v173 = vpop.f32.mrf.mxu0
    %v174 = vadd.f32 %v49, %v173
    %v175 = vpop.f32.mrf.mxu0
    %v176 = vpop.f32.mrf.mxu0
    %v177 = vpop.f32.mrf.mxu0
    %178 = vdwg.mxu0
    %v179 = vmax.f32 %v174, 0.0
    %v180 = vpack.c.bf16 %v179, %v179
    %v189 = vunpack.c.l.b16 %v38
    %v190 = vunpack.c.l.b16 %v39
    %v191 = vunpack.c.l.b16 %v40
    %v192 = vunpack.c.l.b16 %v41
    %v193 = vunpack.c.l.b16 %v42
    %v194 = vunpack.c.l.b16 %v43
    %v195 = vunpack.c.l.b16 %v44
    %v196 = vunpack.c.l.b16 %v45
    %v197 = vpack.c.b16 %v190, %v189
    %v198 = vpack.c.b16 %v192, %v191
    %v199 = vpack.c.b16 %v194, %v193
    %v200 = vpack.c.b16 %v196, %v195
    %v206 = vsel %vm135, %v180, 0
    %208 = vmatprep.subr.bf16.mxu0 0
    %209 = vmatpush1.bf16.msra.mxu0 0
    %210 = vmatprep.subr.bf16.mxu0 0
    %211 = vmatpush1.bf16.msra.mxu0 0
    %212 = vmatprep.subr.bf16.mxu0 0
    %213 = vmatpush1.bf16.msra.mxu0 0
    %214 = vmatprep.subr.bf16.mxu0 0
    %215 = vmatpush1.bf16.msra.mxu0 0
    %216 = vmatprep.subr.bf16.mxu0 0
    %217 = vmatpush1.bf16.msra.mxu0 %v200
    %218 = vmatprep.subr.bf16.mxu0 0
    %219 = vmatpush1.bf16.msra.mxu0 %v199
    %220 = vmatprep.subr.bf16.mxu0 0
    %221 = vmatpush1.bf16.msra.mxu0 %v198
    %222 = vmatprep.subr.bf16.mxu0 0
    %223 = vmatpush1.bf16.msra.mxu0 %v197
    %224 = vmatprep.subr.bf16.mxu0 0
    %225 = vmatpush2.bf16.msra.mxu0 0
    %226 = vmatprep.subr.bf16.mxu0 0
    %227 = vmatpush2.bf16.msra.mxu0 0
    %228 = vmatprep.subr.bf16.mxu0 0
    %229 = vmatpush2.bf16.msra.mxu0 0
    %230 = vmatprep.subr.bf16.mxu0 0
    %231 = vmatpush2.bf16.msra.mxu0 0
    %232 = vmatprep.subr.bf16.mxu0 0
    %233 = vmatpush2.bf16.msra.mxu0 0
    %234 = vmatprep.subr.bf16.mxu0 0
    %235 = vmatpush2.bf16.msra.mxu0 0
    %236 = vmatprep.subr.bf16.mxu0 0
    %237 = vmatpush2.bf16.msra.mxu0 0
    %238 = vmatprep.subr.bf16.mxu0 0
    %239 = vmatpush2.bf16.msra.mxu0 0
    %240 = vmatprep.mubr.bf16.mxu0 0
    %241 = vmatmul.mubr.bf16.gmra.mxu0 %v206
    %v242 = vpop.f32.mrf.mxu0
    %v243 = vadd.f32 %v51, %v242
    %v244 = vpop.f32.mrf.mxu0
    %v245 = vpop.f32.mrf.mxu0
    %v246 = vpop.f32.mrf.mxu0
    %247 = vdwg.mxu0
    %248 = vst [vmem:[%s2] sm:$0xff] %v243
    // Predicated region
    $region14: #{_lambda_.1} parent=1 // pred_check
      _
    $region15: #{_lambda_.1} parent=1 // pred_check_branch
      %250 = sbr.rel (0) target = $region17
    $region16: #{_lambda_.1} parent=1 // pred_region
      _
    $region17: #{_lambda_.1} parent=1 // pred_fallthru
      _
    // Predicated region
    $region18: #{_lambda_.1} parent=1 // pred_check
      _
    $region19: #{_lambda_.1} parent=1 // pred_check_branch
      %252 = sbr.rel (0) target = $region21
    $region20: #{_lambda_.1} parent=1 // pred_region
      _
    $region21: #{_lambda_.1} parent=1 // pred_fallthru
      _
    %253 = vsyncpa [#allocation3], 1

</llo_original>
